<compile_context>
chip_gen: v6e
topology: v6e:2x2x1
jax: 0.10.0
libtpu: 0.0.40
codegen_flags: <defaults>
</compile_context>

<pallas_src>
import functools

import jax
import jax.numpy as jnp
from jax import lax
from jax.experimental import pallas as pl
from jax.experimental.pallas import tpu as pltpu

_MIB = 1024 * 1024


# ---------------------------------------------------------------------------
# Pass 1: lane-dense channel max / mean reduction on x viewed as (N, C, H*W).
# ---------------------------------------------------------------------------
def _pool_kernel(x_ref, max_ref, avg_ref, max_acc, sum_acc, *, c_total):
    """Grid = (batch tiles, lane tiles, channel tiles); channel axis is last.

    x_ref   : VMEM (TB, TC, TL)     input chunk (TL = flattened H*W lanes)
    max_ref : VMEM (TB, 1, TL) f32  channel max   (written on last c step)
    avg_ref : VMEM (TB, 1, TL) f32  channel mean  (written on last c step)
    max_acc : VMEM (TB, TL) f32     running max   (scratch, carried over c)
    sum_acc : VMEM (TB, TL) f32     running sum   (scratch, carried over c)
    """
    TB, TC, TL = x_ref.shape
    c_idx = pl.program_id(2)
    n_c = pl.num_programs(2)

    @pl.when(c_idx == 0)
    def _init():
        max_acc[...] = jnp.full(max_acc.shape, -jnp.inf, dtype=jnp.float32)
        sum_acc[...] = jnp.zeros(sum_acc.shape, dtype=jnp.float32)

    # The channel grid axis uses cdiv, so the last block may hang past C:
    # mask those (garbage) channels out of the max / sum.
    needs_mask = (c_total % TC) != 0
    c_base = c_idx * TC

    def reduce_chunk(start, size):
        xc = x_ref[:, pl.ds(start, size), :].astype(jnp.float32)  # (TB,size,TL)
        if needs_mask:
            ch = c_base + start + lax.broadcasted_iota(jnp.int32, xc.shape, 1)
            valid = ch < c_total
            xm = jnp.where(valid, xc, -jnp.inf)
            xs = jnp.where(valid, xc, 0.0)
        else:
            xm, xs = xc, xc
        return jnp.max(xm, axis=1), jnp.sum(xs, axis=1)

    # Stream the block 8 channels (one sublane tile) per iteration: bounds
    # vreg pressure for large channel chunks, amortizes loop overhead.
    chunk = TC if TC < 8 else 8
    n_chunks = TC // chunk
    tail = TC - n_chunks * chunk

    def body(i, carry):
        m, s = carry
        start = pl.multiple_of(i * chunk, chunk)
        pm, ps = reduce_chunk(start, chunk)
        return jnp.maximum(m, pm), s + ps

    m_part = jnp.full((TB, TL), -jnp.inf, dtype=jnp.float32)
    s_part = jnp.zeros((TB, TL), dtype=jnp.float32)
    m_part, s_part = lax.fori_loop(0, n_chunks, body, (m_part, s_part),
                                   unroll=min(n_chunks, 8))
    if tail:  # only possible when TC == C and C is not a multiple of 8
        pm, ps = reduce_chunk(n_chunks * chunk, tail)
        m_part = jnp.maximum(m_part, pm)
        s_part = s_part + ps

    max_acc[...] = jnp.maximum(max_acc[...], m_part)
    sum_acc[...] = sum_acc[...] + s_part

    @pl.when(c_idx == n_c - 1)
    def _finalize():
        max_ref[...] = max_acc[...][:, None, :]
        # NOTE: mean as running-sum * (1/C); differs from exact division by ulps.
        avg_ref[...] = (sum_acc[...] * (1.0 / c_total))[:, None, :]


# ---------------------------------------------------------------------------
# Pass 2: tiny kxk 'same' conv over the two pooled planes + sigmoid.
# ---------------------------------------------------------------------------
def _conv_sigmoid_kernel(w_ref, xmax_ref, xavg_ref, o_ref, *, k):
    """Correct only because each block holds the FULL H and W (the roll+mask
    trick has no halo handling); blocks are only ever tiled over batch.

    w_ref    : SMEM (2*k*k,) f32   flattened Conv2d(2, 1, k) weight
    xmax_ref : VMEM (TB, H, W) f32
    xavg_ref : VMEM (TB, H, W) f32
    o_ref    : VMEM (TB, 1, H, W)
    """
    TB, H, W = xmax_ref.shape
    p = (k - 1) // 2
    x_max = xmax_ref[...]
    x_avg = xavg_ref[...]

    iy = lax.broadcasted_iota(jnp.int32, (H, W), 0)
    ix = lax.broadcasted_iota(jnp.int32, (H, W), 1)

    # Per tap: form the linear combination of the two planes once, shift it
    # with XLU rolls, zero the wrapped border with iota masks, accumulate.
    acc = None
    for dy in range(k):
        for dx in range(k):
            w_max = w_ref[dy * k + dx]            # in-channel 0 = max plane
            w_avg = w_ref[k * k + dy * k + dx]    # in-channel 1 = avg plane
            tap = w_max * x_max + w_avg * x_avg   # (TB, H, W) f32
            sy, sx = dy - p, dx - p
            if sy != 0:
                tap = pltpu.roll(tap, (-sy) % H, axis=1)
            if sx != 0:
                tap = pltpu.roll(tap, (-sx) % W, axis=2)
            conds = []
            if sy > 0:
                conds.append(iy < H - sy)
            if sy < 0:
                conds.append(iy >= -sy)
            if sx > 0:
                conds.append(ix < W - sx)
            if sx < 0:
                conds.append(ix >= -sx)
            if conds:
                mask = conds[0]
                for cnd in conds[1:]:
                    mask = mask & cnd
                tap = jnp.where(mask, tap, 0.0)
            acc = tap if acc is None else acc + tap

    o_ref[...] = jax.nn.sigmoid(acc)[:, None, :, :].astype(o_ref.dtype)


# ---------------------------------------------------------------------------
# Tiling / budget helpers.
# ---------------------------------------------------------------------------
def _vmem_budget():
    """Return (pool-pass VMEM target bytes, vmem_limit_bytes), per chip gen."""
    cap = None
    try:
        cap = int(pltpu.get_tpu_info().vmem_capacity_bytes)
    except Exception:  # interpret mode / older jax: fall back conservatively
        cap = None
    if cap is not None and cap >= 96 * _MIB:
        # v5e / v6e: 128 MiB physical VMEM -> ~16-24 MiB input blocks.
        return 48 * _MIB, 80 * _MIB
    # v7x (64 MiB per TensorCore) or unknown: ~10-12 MiB input blocks.
    return 24 * _MIB, 48 * _MIB


def _choose_pool_tiles(n, c, l, itemsize, target_bytes):
    """Pick (tb, tc, tl) for the reduction pass under an honest VMEM budget."""
    def col_bytes(tc):
        # VMEM bytes per (batch, lane) column of one tile:
        #   2x double-buffered input rows      : 2 * tc * itemsize
        #   two f32 accumulator scratch planes : 2 * 4
        #   2x double-buffered f32 max/avg out : 2 * 2 * 4
        return 2 * tc * itemsize + 2 * 4 + 2 * 2 * 4

    if l * col_bytes(c) <= target_bytes:
        # Whole (C, H*W) slab of one batch element fits: single channel step,
        # full lane rows; spend the remaining budget on the batch tile.
        tc, tl = c, l
        tb = max(1, min(n, target_bytes // (l * col_bytes(c))))
    elif l * col_bytes(8) <= target_bytes:
        # Full lane rows, tile the channel axis (multiple of 8 sublanes).
        tb, tl = 1, l
        tc = (target_bytes // l - 2 * 4 - 2 * 2 * 4) // (2 * itemsize) // 8 * 8
        tc = max(8, min(c, tc))
    else:
        # Huge spatial map: tile the flattened lane axis too (multiple of 128).
        tb = 1
        tc = c if c < 8 else 8
        tl = min(l, max(128, target_bytes // col_bytes(tc) // 128 * 128))

    # v7x megacore: keep at least two "parallel" grid steps when possible.
    if pl.cdiv(n, tb) * pl.cdiv(l, tl) < 2:
        if n >= 2:
            tb = max(1, n // 2)
        elif l >= 256 and tl >= l:
            tl = ((-(-l // 2) + 127) // 128) * 128
    return tb, tc, tl


# ---------------------------------------------------------------------------
# Public wrapper.
# ---------------------------------------------------------------------------
def ld_sam(x, conv_weight, *, kernel_size=3):
    """LD_SAM forward.  x: (N, C, H, W) f32/bf16; conv_weight: (1, 2, k, k).

    Returns the (N, 1, H, W) spatial-attention map in x.dtype.  The kernel is
    HBM-read bound on N*C*H*W: feeding bf16 activations halves traffic; the
    channel reduction always accumulates in f32.
    """
    assert kernel_size % 2 == 1, "kernel size must be odd for 'same' padding"
    N, C, H, W = x.shape
    k = kernel_size
    L = H * W
    itemsize = jnp.dtype(x.dtype).itemsize

    pool_target, vmem_limit = _vmem_budget()
    tb, tc, tl = _choose_pool_tiles(N, C, L, itemsize, pool_target)
    grid1 = (pl.cdiv(N, tb), pl.cdiv(L, tl), pl.cdiv(C, tc))

    # ---- pass 1: channel max / mean, lane-dense over the flattened H*W axis.
    x_flat = x.reshape(N, C, L)
    pool = functools.partial(_pool_kernel, c_total=C)
    cost1 = pl.CostEstimate(
        flops=int(2 * N * C * L),
        transcendentals=0,
        bytes_accessed=int(N * C * L * itemsize + 2 * N * L * 4))

    x_max, x_avg = pl.pallas_call(
        pool,
        out_shape=(jax.ShapeDtypeStruct((N, 1, L), jnp.float32),
                   jax.ShapeDtypeStruct((N, 1, L), jnp.float32)),
        grid_spec=pltpu.PrefetchScalarGridSpec(
            num_scalar_prefetch=0,
            grid=grid1,
            in_specs=[pl.BlockSpec((tb, tc, tl), lambda n, l, c: (n, c, l))],
            out_specs=[pl.BlockSpec((tb, 1, tl), lambda n, l, c: (n, 0, l)),
                       pl.BlockSpec((tb, 1, tl), lambda n, l, c: (n, 0, l))],
            scratch_shapes=[pltpu.VMEM((tb, tl), jnp.float32),   # running max
                            pltpu.VMEM((tb, tl), jnp.float32)],  # running sum
        ),
        compiler_params=pltpu.CompilerParams(
            dimension_semantics=("parallel", "parallel", "arbitrary"),
            vmem_limit_bytes=vmem_limit),
        cost_estimate=cost1,
    )(x_flat)

    # ---- pass 2: tiny kxk 'same' conv + sigmoid on pooled (N, H, W) planes.
    x_max = x_max.reshape(N, H, W)
    x_avg = x_avg.reshape(N, H, W)
    w_flat = conv_weight.reshape(2 * k * k).astype(jnp.float32)

    # ~2 f32 inputs (2x buffered) + output + a few conv temporaries per row.
    conv_row_bytes = 32 * H * W
    tb2 = max(1, min(N, (8 * _MIB) // max(1, conv_row_bytes)))
    if N >= 2:
        tb2 = min(tb2, max(1, N // 2))        # keep 2 parallel steps for v7x
    grid2 = (pl.cdiv(N, tb2),)

    conv = functools.partial(_conv_sigmoid_kernel, k=k)
    cost2 = pl.CostEstimate(
        flops=int(N * L * (4 * k * k + 2)),
        transcendentals=int(N * L),
        bytes_accessed=int(2 * N * L * 4 + N * L * itemsize + 2 * k * k * 4))

    return pl.pallas_call(
        conv,
        out_shape=jax.ShapeDtypeStruct((N, 1, H, W), x.dtype),
        grid_spec=pltpu.PrefetchScalarGridSpec(
            num_scalar_prefetch=0,
            grid=grid2,
            in_specs=[pl.BlockSpec(memory_space=pltpu.MemorySpace.SMEM),
                      pl.BlockSpec((tb2, H, W), lambda n: (n, 0, 0)),
                      pl.BlockSpec((tb2, H, W), lambda n: (n, 0, 0))],
            out_specs=pl.BlockSpec((tb2, 1, H, W), lambda n: (n, 0, 0, 0)),
        ),
        compiler_params=pltpu.CompilerParams(
            dimension_semantics=("parallel",),
            vmem_limit_bytes=vmem_limit),
        cost_estimate=cost2,
    )(w_flat, x_max, x_avg)


def _reference(x, conv_weight):
    """Pure-JAX reference (same math as the PyTorch module)."""
    x_max = jnp.max(x, axis=1, keepdims=True)
    x_avg = jnp.mean(x, axis=1, keepdims=True)
    x_cat = jnp.concatenate([x_max, x_avg], axis=1)
    y = jax.lax.conv_general_dilated(
        x_cat, conv_weight, window_strides=(1, 1), padding="SAME",
        dimension_numbers=("NCHW", "OIHW", "NCHW"))
    return jax.nn.sigmoid(y)


if __name__ == "__main__":
    key = jax.random.PRNGKey(0)
    kx, kw = jax.random.split(key)

    N, C, H, W = 2, 4, 16, 16
    k = 3
    x = jax.random.normal(kx, (N, C, H, W), dtype=jnp.float32)
    # Deterministic Conv2d(2, 1, k, bias=False) weight, PyTorch-style uniform init.
    fan_in = 2 * k * k
    bound = 1.0 / (fan_in ** 0.5)
    conv_weight = jax.random.uniform(kw, (1, 2, k, k), jnp.float32, -bound, bound)

    out = ld_sam(x, conv_weight, kernel_size=k)
    out = jax.block_until_ready(out)

    ref = _reference(x, conv_weight)
    assert out.shape == (N, 1, H, W)
    assert jnp.allclose(out, ref, atol=1e-5, rtol=1e-5), "mismatch vs reference"
    print("KERNEL_OK")
</pallas_src>

<mosaic_0001>
module attributes {stable_mosaic.version = 11 : i64} {
  func.func @_pool_kernel(%arg0: i32, %arg1: i32, %arg2: i32, %arg3: memref<1x4x256xf32, #tpu.memory_space<vmem>>, %arg4: memref<1x1x256xf32, #tpu.memory_space<vmem>>, %arg5: memref<1x1x256xf32, #tpu.memory_space<vmem>>, %arg6: memref<1x256xf32, #tpu.memory_space<vmem>>, %arg7: memref<1x256xf32, #tpu.memory_space<vmem>>) attributes {dimension_semantics = [#tpu.dimension_semantics<parallel>, #tpu.dimension_semantics<parallel>, #tpu.dimension_semantics<arbitrary>], iteration_bounds = array<i64: 2, 1, 1>, scalar_prefetch = 0 : i64, scratch_operands = 2 : i64, tpu.core_type = #tpu.core_type<tc>, window_params = [{transform_indices = @transform_0, window_bounds = array<i64: 1, 4, 256>}, {transform_indices = @transform_1, window_bounds = array<i64: 1, 1, 256>}, {transform_indices = @transform_2, window_bounds = array<i64: 1, 1, 256>}]} {
    %c0_i32 = arith.constant 0 : i32
    %0 = arith.cmpi eq, %arg2, %c0_i32 : i32
    %1 = arith.extui %0 : i1 to i32
    %c0_i32_0 = arith.constant 0 : i32
    %2 = arith.cmpi ne, %1, %c0_i32_0 : i32
    scf.if %2 {
      %cst_16 = arith.constant 0xFF800000 : f32
      %22 = vector.broadcast %cst_16 : f32 to vector<1x256xf32>
      %c0_17 = arith.constant 0 : index
      %c0_18 = arith.constant 0 : index
      %23 = vector.load %arg6[%c0_17, %c0_18] : memref<1x256xf32, #tpu.memory_space<vmem>>, vector<1x256xf32>
      tpu.vector_store %arg6[%c0_17, %c0_18], %22 {strides = array<i32>} : memref<1x256xf32, #tpu.memory_space<vmem>>, vector<1x256xf32>,
      %cst_19 = arith.constant 0.000000e+00 : f32
      %24 = vector.broadcast %cst_19 : f32 to vector<1x256xf32>
      %c0_20 = arith.constant 0 : index
      %c0_21 = arith.constant 0 : index
      %25 = vector.load %arg7[%c0_20, %c0_21] : memref<1x256xf32, #tpu.memory_space<vmem>>, vector<1x256xf32>
      tpu.vector_store %arg7[%c0_20, %c0_21], %24 {strides = array<i32>} : memref<1x256xf32, #tpu.memory_space<vmem>>, vector<1x256xf32>,
    } else {
    }
    %cst = arith.constant 0xFF800000 : f32
    %3 = vector.broadcast %cst : f32 to vector<1x256xf32>
    %cst_1 = arith.constant 0.000000e+00 : f32
    %4 = vector.broadcast %cst_1 : f32 to vector<1x256xf32>
    %c0_i32_2 = arith.constant 0 : i32
    %c4_i32 = arith.constant 4 : i32
    %5 = arith.muli %c0_i32_2, %c4_i32 : i32
    %6 = tpu.assume_multiple %5, 4 : i32
    %c0 = arith.constant 0 : index
    %7 = arith.index_cast %6 : i32 to index
    %c0_3 = arith.constant 0 : index
    %8 = vector.load %arg3[%c0, %7, %c0_3] : memref<1x4x256xf32, #tpu.memory_space<vmem>>, vector<1x4x256xf32>
    %cst_4 = arith.constant dense<0xFF800000> : vector<1x256xf32>
    %9 = vector.multi_reduction <maximumf>, %8, %cst_4 [1] : vector<1x4x256xf32> to vector<1x256xf32>
    %cst_5 = arith.constant dense<0.000000e+00> : vector<1x256xf32>
    %10 = vector.multi_reduction <add>, %8, %cst_5 [1] : vector<1x4x256xf32> to vector<1x256xf32>
    %11 = arith.maximumf %3, %9 : vector<1x256xf32>
    %12 = arith.addf %4, %10 : vector<1x256xf32>
    %c1_i32 = arith.constant 1 : i32
    %c0_6 = arith.constant 0 : index
    %c0_7 = arith.constant 0 : index
    %13 = vector.load %arg6[%c0_6, %c0_7] : memref<1x256xf32, #tpu.memory_space<vmem>>, vector<1x256xf32>
    %14 = arith.maximumf %13, %11 : vector<1x256xf32>
    %c0_8 = arith.constant 0 : index
    %c0_9 = arith.constant 0 : index
    %15 = vector.load %arg6[%c0_8, %c0_9] : memref<1x256xf32, #tpu.memory_space<vmem>>, vector<1x256xf32>
    tpu.vector_store %arg6[%c0_8, %c0_9], %14 {strides = array<i32>} : memref<1x256xf32, #tpu.memory_space<vmem>>, vector<1x256xf32>,
    %c0_10 = arith.constant 0 : index
    %c0_11 = arith.constant 0 : index
    %16 = vector.load %arg7[%c0_10, %c0_11] : memref<1x256xf32, #tpu.memory_space<vmem>>, vector<1x256xf32>
    %17 = arith.addf %16, %12 : vector<1x256xf32>
    %c0_12 = arith.constant 0 : index
    %c0_13 = arith.constant 0 : index
    %18 = vector.load %arg7[%c0_12, %c0_13] : memref<1x256xf32, #tpu.memory_space<vmem>>, vector<1x256xf32>
    tpu.vector_store %arg7[%c0_12, %c0_13], %17 {strides = array<i32>} : memref<1x256xf32, #tpu.memory_space<vmem>>, vector<1x256xf32>,
    %c0_i32_14 = arith.constant 0 : i32
    %19 = arith.cmpi eq, %arg2, %c0_i32_14 : i32
    %20 = arith.extui %19 : i1 to i32
    %c0_i32_15 = arith.constant 0 : i32
    %21 = arith.cmpi ne, %20, %c0_i32_15 : i32
    scf.if %21 {
      %c0_16 = arith.constant 0 : index
      %c0_17 = arith.constant 0 : index
      %22 = vector.load %arg6[%c0_16, %c0_17] : memref<1x256xf32, #tpu.memory_space<vmem>>, vector<1x256xf32>
      %23 = vector.shape_cast %22 : vector<1x256xf32> to vector<1x1x256xf32>
      %c0_18 = arith.constant 0 : index
      %c0_19 = arith.constant 0 : index
      %c0_20 = arith.constant 0 : index
      %24 = vector.load %arg4[%c0_18, %c0_19, %c0_20] : memref<1x1x256xf32, #tpu.memory_space<vmem>>, vector<1x1x256xf32>
      tpu.vector_store %arg4[%c0_18, %c0_19, %c0_20], %23 {strides = array<i32>} : memref<1x1x256xf32, #tpu.memory_space<vmem>>, vector<1x1x256xf32>,
      %c0_21 = arith.constant 0 : index
      %c0_22 = arith.constant 0 : index
      %25 = vector.load %arg7[%c0_21, %c0_22] : memref<1x256xf32, #tpu.memory_space<vmem>>, vector<1x256xf32>
      %cst_23 = arith.constant 2.500000e-01 : f32
      %26 = vector.broadcast %cst_23 : f32 to vector<1x256xf32>
      %27 = arith.mulf %25, %26 : vector<1x256xf32>
      %28 = vector.shape_cast %27 : vector<1x256xf32> to vector<1x1x256xf32>
      %c0_24 = arith.constant 0 : index
      %c0_25 = arith.constant 0 : index
      %c0_26 = arith.constant 0 : index
      %29 = vector.load %arg5[%c0_24, %c0_25, %c0_26] : memref<1x1x256xf32, #tpu.memory_space<vmem>>, vector<1x1x256xf32>
      tpu.vector_store %arg5[%c0_24, %c0_25, %c0_26], %28 {strides = array<i32>} : memref<1x1x256xf32, #tpu.memory_space<vmem>>, vector<1x1x256xf32>,
    } else {
    }
    return
  }
  func.func @transform_0(%arg0: i32, %arg1: i32, %arg2: i32) -> (i32, i32, i32) {
    %c0_i32 = arith.constant 0 : i32
    return %arg0, %arg2, %arg1 : i32, i32, i32
  }
  func.func @transform_1(%arg0: i32, %arg1: i32, %arg2: i32) -> (i32, i32, i32) {
    %c0_i32 = arith.constant 0 : i32
    %c0_i32_0 = arith.constant 0 : i32
    return %arg0, %c0_i32, %arg1 : i32, i32, i32
  }
  func.func @transform_2(%arg0: i32, %arg1: i32, %arg2: i32) -> (i32, i32, i32) {
    %c0_i32 = arith.constant 0 : i32
    %c0_i32_0 = arith.constant 0 : i32
    return %arg0, %c0_i32, %arg1 : i32, i32, i32
  }
}

</mosaic_0001>

<llo_original>
// kernel: tpu_custom_call.1
$region0: #{tpu_custom_call.1}
  #allocation0 [shape = 'u32[]', space=smem, size = 0x4, offset = 0x4, fixed_abs, tag = 'smem constant byte address 0x4 - core index']
  #allocation1 [shape = 'u32[144,128]{1,0:T(1,128)}', space=vmem, size = 0x12000, scoped, tag = 'internal scratch']
  #allocation2 [shape = 'f32[1,256]{1,0:T(1,128)}', space=vmem, size = 0x400, scoped, tag = 'scratch operand']
  #allocation3 [shape = 'f32[1,256]{1,0:T(1,128)}', space=vmem, size = 0x400, scoped, tag = 'scratch operand']
  %s0 = inlined_call_operand.hbm [shape: f32[2,4,256], index: 0, kind: input, shape index: {}]
  %s1 = inlined_call_operand.hbm [shape: f32[2,1,256], index: 1, kind: output, shape index: {0}]
  %s2 = inlined_call_operand.hbm [shape: f32[2,1,256], index: 2, kind: output, shape index: {1}]
  %3 = xla_tuple %s1, %s2
  %s4 = sld [smem:[#allocation0]]
  $region57: #{tpu_custom_call.1} parent=0
    _
  %s6 = ssub.s32 1, %s4
  %s7 = scalar_select 0, %s6, %s4
  $region1: #{tpu_custom_call.1} parent=0
    #allocation4 [shape = 'u8[8192]{0}', space=vmem, size = 0x2000, scoped, tag = 'input window, operand 0']
    #allocation5 [shape = 's32[2]{0}', space=sflag, size = 0x8, scoped, tag = 'scoped memory for tpu_custom_call.1']
    #allocation6 [shape = 's32[2]{0}', space=sflag, size = 0x8, scoped, tag = 'scoped memory for tpu_custom_call.1']
    #allocation7 [shape = 'u8[2048]{0}', space=vmem, size = 0x800, scoped, tag = 'output window, operand 0']
    #allocation8 [shape = 'u8[2048]{0}', space=vmem, size = 0x800, scoped, tag = 'output window, operand 1']
    #allocation9 [shape = 's32[2]{0}', space=sflag, size = 0x8, scoped, tag = 'scoped memory for tpu_custom_call.1']
    %8 = vsyncpa [#allocation5], 0
    %s9 = scalar_lea.sflag [#allocation5], 1
    %10 = vsyncpa %s9, 0
    %11 = vsyncpa [#allocation6], 0
    %s12 = scalar_lea.sflag [#allocation6], 1
    %13 = vsyncpa %s12, 0
    %14 = vsyncpa [#allocation9], 0
    %s15 = scalar_lea.sflag [#allocation9], 1
    %16 = vsyncpa %s15, 0
    loop: start=0, step=1, limit=4
    $region2: #{tpu_custom_call.1} parent=1 // loop_pre_header
      _
    $region3: #{tpu_custom_call.1} parent=1 // loop_header
      %s18 = sphi 0, %s22
      %p19 = scmp.ge.s32.totalorder %s18, 4
      %s25 = sphi 0, %s44
      %s26 = sphi 0, %s40
      %s27 = sphi 0, %s36
      %s28 = sphi 0, %s25
      %s29 = sphi 0, %s26
      %s30 = sphi 0, %s27
      %s31 = sphi 0, %s28
      %s32 = sphi 0, %s29
      %s33 = sphi 0, %s30
      %s51 = sphi 0, %s53
      %s54 = sphi 0, %s51
      %s55 = sphi 0, %s54
      %s71 = sphi 0, %s55
      %s79 = sphi 0, %s81
      %s82 = sphi 0, %s79
      %s83 = sphi 0, %s82
      %s99 = sphi 0, %s83
      %s107 = sphi 0, %s109
      %s110 = sphi 0, %s107
      %s111 = sphi 0, %s110
      %s127 = sphi 0, %s111
    $region4: #{tpu_custom_call.1} parent=1 // loop_header_branch
      %21 = sbr.rel (%p19) target = $region8
    $region5: #{tpu_custom_call.1} parent=1 // loop_body
      %s23 = ssub.s32 %s18, 1
      %s24 = ssub.s32 %s18, 2
      %s34 = sadd.s32 1, %s27
      %p35 = scmp.ge.s32.totalorder %s34, 1
      %s36 = scalar_select %p35, 0, %s34
      %s37 = sadd.s32 1, %s26
      %s38 = scalar_select %p35, %s37, %s26
      %p39 = scmp.ge.s32.totalorder %s38, 1
      %s40 = scalar_select %p39, 0, %s38
      %s41 = sadd.s32 1, %s25
      %s42 = scalar_select %p39, %s41, %s25
      %p43 = scmp.ge.s32.totalorder %s42, 2
      %s44 = scalar_select %p43, 0, %s42
      %s45 = ssub.s32 %s25, %s44
      %s46 = ssub.s32 %s27, %s36
      %s47 = sor.u32 %s45, %s46
      %s48 = ssub.s32 %s26, %s40
      %s49 = sor.u32 %s47, %s48
      %p50 = scmp.eq.s32.totalorder %s49, 0
      %s52 = sadd.s32 %s51, 1
      %s53 = scalar_select %p50, %s51, %s52
      %p56 = pneg %p50
      %p57 = scmp.eq.s32.totalorder %s18, 1
      %p58 = por %p56, %p57
      %p59 = scmp.ne.s32.totalorder %s51, %s54
      %p60 = scmp.eq.s32.totalorder %s18, 0
      %p61 = por %p59, %p60
      %p62 = scmp.ne.s32.totalorder %s51, %s54
      %p63 = scmp.eq.s32.totalorder %s23, 1
      %p64 = por %p62, %p63
      %p65 = scmp.ne.s32.totalorder %s54, %s55
      %p66 = scmp.eq.s32.totalorder %s23, 0
      %p67 = por %p65, %p66
      %p68 = scmp.ne.s32.totalorder %s54, %s55
      %p69 = scmp.eq.s32.totalorder %s24, 1
      %p70 = por %p68, %p69
      %p72 = scmp.ne.s32.totalorder %s55, %s71
      %p73 = scmp.eq.s32.totalorder %s24, 0
      %p74 = por %p72, %p73
      %s75 = ssub.s32 %s25, %s44
      %s76 = ssub.s32 %s26, %s40
      %s77 = sor.u32 %s75, %s76
      %p78 = scmp.eq.s32.totalorder %s77, 0
      %s80 = sadd.s32 %s79, 1
      %s81 = scalar_select %p78, %s79, %s80
      %p84 = pneg %p78
      %p85 = scmp.eq.s32.totalorder %s18, 1
      %p86 = por %p84, %p85
      %p87 = scmp.ne.s32.totalorder %s79, %s82
      %p88 = scmp.eq.s32.totalorder %s18, 0
      %p89 = por %p87, %p88
      %p90 = scmp.ne.s32.totalorder %s79, %s82
      %p91 = scmp.eq.s32.totalorder %s23, 1
      %p92 = por %p90, %p91
      %p93 = scmp.ne.s32.totalorder %s82, %s83
      %p94 = scmp.eq.s32.totalorder %s23, 0
      %p95 = por %p93, %p94
      %p96 = scmp.ne.s32.totalorder %s82, %s83
      %p97 = scmp.eq.s32.totalorder %s24, 1
      %p98 = por %p96, %p97
      %p100 = scmp.ne.s32.totalorder %s83, %s99
      %p101 = scmp.eq.s32.totalorder %s24, 0
      %p102 = por %p100, %p101
      %s103 = ssub.s32 %s25, %s44
      %s104 = ssub.s32 %s26, %s40
      %s105 = sor.u32 %s103, %s104
      %p106 = scmp.eq.s32.totalorder %s105, 0
      %s108 = sadd.s32 %s107, 1
      %s109 = scalar_select %p106, %s107, %s108
      %p112 = pneg %p106
      %p113 = scmp.eq.s32.totalorder %s18, 1
      %p114 = por %p112, %p113
      %p115 = scmp.ne.s32.totalorder %s107, %s110
      %p116 = scmp.eq.s32.totalorder %s18, 0
      %p117 = por %p115, %p116
      %p118 = scmp.ne.s32.totalorder %s107, %s110
      %p119 = scmp.eq.s32.totalorder %s23, 1
      %p120 = por %p118, %p119
      %p121 = scmp.ne.s32.totalorder %s110, %s111
      %p122 = scmp.eq.s32.totalorder %s23, 0
      %p123 = por %p121, %p122
      %p124 = scmp.ne.s32.totalorder %s110, %s111
      %p125 = scmp.eq.s32.totalorder %s24, 1
      %p126 = por %p124, %p125
      %p128 = scmp.ne.s32.totalorder %s111, %s127
      %p129 = scmp.eq.s32.totalorder %s24, 0
      %p130 = por %p128, %p129
      %p131 = scmp.le.s32.totalorder 1, %s18
      %p132 = scmp.lt.s32.totalorder %s18, 3
      %p133 = pnand %p131, %p132
      %p134 = pneg %p133
      // Predicated region
      $region9: #{tpu_custom_call.1} parent=5 // pred_check
        _
      $region10: #{tpu_custom_call.1} parent=5 // pred_check_branch
        %136 = sbr.rel (%p133) target = $region12
      $region11: #{tpu_custom_call.1} parent=5 // pred_region
        %s137 = ssub.s32 %s18, 1
      $region12: #{tpu_custom_call.1} parent=5 // pred_fallthru
        _
      %p138 = scmp.lt.s32.totalorder %s18, 2
      // Predicated region
      $region13: #{tpu_custom_call.1} parent=5 // pred_check
        %p139 = pneg %p138
      $region14: #{tpu_custom_call.1} parent=5 // pred_check_branch
        %141 = sbr.rel (%p139) target = $region16
      $region15: #{tpu_custom_call.1} parent=5 // pred_region
        // Predicated region
        $region17: #{tpu_custom_call.1} parent=15 // pred_check
          %p142 = pneg %p61
        $region18: #{tpu_custom_call.1} parent=15 // pred_check_branch
          %144 = sbr.rel (%p142) target = $region20
        $region19: #{tpu_custom_call.1} parent=15 // pred_region
          %s145 = sand.u32 %s51, 1
          %s146 = scalar_lea.sflag [#allocation5], %s145
          %s147 = sand.u32 %s51, 1
          %s148 = smul.addr %s147, 8
          %s149 = scalar_lea.vmem [#allocation4], %s148
          %s150 = smul.u32 2, %s26
          %s152 = ssub.s32 128, 128
          %153 = vsyncadd %s146, %s152
          %s154 = smul.addr %s27, 2
          %s155 = sadd.s32 %s150, %s154
          %s156 = smul.addr %s25, 2
          %s157 = sadd.s32 %s155, %s156
          %s158 = smul.addr %s157, 64
          %s159 = scalar_lea.hbm %s0, %s158
          %s161 = sshll.u32 %s149, 4
          %s162 = int_to_ptr.vmem [resolvable:$true] %s161
          %164 = dma.hbm_to_vmem [thread:$0]  %s159, 128, %s162, %s146
        $region20: #{tpu_custom_call.1} parent=15 // pred_fallthru
          _
      $region16: #{tpu_custom_call.1} parent=5 // pred_fallthru
        _
      %p165 = scmp.le.s32.totalorder 1, %s18
      %p166 = scmp.lt.s32.totalorder %s18, 3
      %p167 = pnand %p165, %p166
      %p168 = pneg %p167
      // Predicated region
      $region21: #{tpu_custom_call.1} parent=5 // pred_check
        _
      $region22: #{tpu_custom_call.1} parent=5 // pred_check_branch
        %170 = sbr.rel (%p167) target = $region24
      $region23: #{tpu_custom_call.1} parent=5 // pred_region
        %s171 = ssub.s32 %s18, 1
        %s172 = sand.u32 %s54, 1
        %s173 = scalar_lea.sflag [#allocation5], %s172
        %s174 = sand.u32 %s54, 1
        %s175 = smul.addr %s174, 8
        %s176 = scalar_lea.vmem [#allocation4], %s175
        // Predicated region
        $region25: #{tpu_custom_call.1} parent=23 // pred_check
          %p177 = pneg %p67
        $region26: #{tpu_custom_call.1} parent=23 // pred_check_branch
          %179 = sbr.rel (%p177) target = $region28
        $region27: #{tpu_custom_call.1} parent=23 // pred_region
          %180 = dma.done %s173, 128
        $region28: #{tpu_custom_call.1} parent=23 // pred_fallthru
          _
        %s181 = sand.u32 %s54, 1
        %s182 = scalar_lea.sflag [#allocation5], %s181
        %s183 = sand.u32 %s54, 1
        %s184 = smul.addr %s183, 8
        %s185 = scalar_lea.vmem [#allocation4], %s184
        %p186 = pneg %p67
        %p187 = pneg %p64
        %p188 = pneg %p95
        %p189 = pneg %p92
        %s190 = sand.u32 %s82, 1
        %s191 = scalar_lea.sflag [#allocation6], %s190
        %s192 = sand.u32 %s82, 1
        %s193 = smul.addr %s192, 2
        %s194 = scalar_lea.vmem [#allocation7], %s193
        %p195 = pneg %p123
        %p196 = pneg %p120
        %s197 = sand.u32 %s110, 1
        %s198 = scalar_lea.sflag [#allocation9], %s197
        %s199 = sand.u32 %s110, 1
        %s200 = smul.addr %s199, 2
        %s201 = scalar_lea.vmem [#allocation8], %s200
        %s202 = smul.u32 2, %s29
        %s203 = smul.u32 2, %s29
        %s204 = smul.u32 2, %s29
        %p205 = scmp.eq.s32.totalorder %s30, 0
        // Predicated region
        $region29: #{tpu_custom_call.1} parent=23 // pred_check
          %p206 = pneg %p205
        $region30: #{tpu_custom_call.1} parent=23 // pred_check_branch
          %208 = sbr.rel (%p206) target = $region32
        $region31: #{tpu_custom_call.1} parent=23 // pred_region
          %v209 = vlaneseq
          %vm210 = vcmp.ge.s32.totalorder %v209, 0
          %vm211 = vcmp.lt.s32.totalorder %v209, 256
          %vm212 = vmand %vm210, %vm211
          %213 = vst.msk [vmem:[#allocation2] sm:$0x3] %vm212, -inf
          %214 = vst.msk [vmem:[#allocation3] sm:$0x3] %vm212, 0.0
        $region32: #{tpu_custom_call.1} parent=23 // pred_fallthru
          _
        %s215 = smul.u32 0, 2
        %s216 = smul.addr %s215, 4
        %s217 = scalar_lea.vmem %s176, %s216 [#allocation4]
        %v218 = vld [vmem:[%s217] sm:$0xff]
        %v220 = vcombine.high %v218, %v218
        %vm222 = vcmask 1043456
        %v223 = vsel %vm222, %v218, -inf
        %v224 = vrot.slane %v223, 4
        %v225 = vmax.f32 %v223, %v224
        %v226 = vrot.slane %v225, 2
        %v227 = vmax.f32 %v225, %v226
        %v228 = vrot.slane %v227, 1
        %v229 = vmax.f32 %v227, %v228
        %v230 = vsel %vm222, %v220, -inf
        %v231 = vrot.slane %v230, 4
        %v232 = vmax.f32 %v230, %v231
        %v233 = vrot.slane %v232, 2
        %v234 = vmax.f32 %v232, %v233
        %v235 = vrot.slane %v234, 1
        %v236 = vmax.f32 %v234, %v235
        %v237 = vsel %vm222, %v218, 0.0
        %v238 = vrot.slane %v237, 4
        %v239 = vadd.f32 %v237, %v238
        %v240 = vrot.slane %v239, 2
        %v241 = vadd.f32 %v239, %v240
        %v242 = vrot.slane %v241, 1
        %v243 = vadd.f32 %v241, %v242
        %v244 = vsel %vm222, %v220, 0.0
        %v245 = vrot.slane %v244, 4
        %v246 = vadd.f32 %v244, %v245
        %v247 = vrot.slane %v246, 2
        %v248 = vadd.f32 %v246, %v247
        %v249 = vrot.slane %v248, 1
        %v250 = vadd.f32 %v248, %v249
        %v251 = vadd.f32 %v243, 0.0
        %v252 = vadd.f32 %v250, 0.0
        %v253 = vld [vmem:[#allocation2] sm:$0x3]
        %v256 = vcombine.low %v229, %v236
        %v258 = vunpack.c.l.s4 1966171168
        %v259 = vunpack.c.0.s8 %v258
        %v260 = vlaneseq
        %v261 = vshrl.u32 %v260, 7
        %v262 = vsub.s32 %v259, %v261
        %v263 = vrot.slane %v256, %v262
        %v265 = vunpack.c.l.s4 1966171168
        %v266 = vunpack.c.0.s8 %v265
        %v267 = vlaneseq
        %v268 = vshrl.u32 %v267, 7
        %v269 = vsub.s32 %v266, %v268
        %v270 = vrot.slane %v263, %v269
        %v272 = vmax.f32 %v253, %v270
        %v273 = vlaneseq
        %vm274 = vcmp.ge.s32.totalorder %v273, 0
        %vm275 = vcmp.lt.s32.totalorder %v273, 256
        %vm276 = vmand %vm274, %vm275
        %277 = vst.msk [vmem:[#allocation2] sm:$0x3] %vm276, %v272
        %v278 = vld [vmem:[#allocation3] sm:$0x3]
        %v281 = vcombine.low %v251, %v252
        %v283 = vunpack.c.l.s4 1966171168
        %v284 = vunpack.c.0.s8 %v283
        %v285 = vlaneseq
        %v286 = vshrl.u32 %v285, 7
        %v287 = vsub.s32 %v284, %v286
        %v288 = vrot.slane %v281, %v287
        %v290 = vunpack.c.l.s4 1966171168
        %v291 = vunpack.c.0.s8 %v290
        %v292 = vlaneseq
        %v293 = vshrl.u32 %v292, 7
        %v294 = vsub.s32 %v291, %v293
        %v295 = vrot.slane %v288, %v294
        %v297 = vadd.f32 %v278, %v295
        %298 = vst.msk [vmem:[#allocation3] sm:$0x3] %vm276, %v297
        // Predicated region
        $region33: #{tpu_custom_call.1} parent=23 // pred_check
          %p299 = pneg %p205
        $region34: #{tpu_custom_call.1} parent=23 // pred_check_branch
          %301 = sbr.rel (%p299) target = $region36
        $region35: #{tpu_custom_call.1} parent=23 // pred_region
          %v302 = vld [vmem:[#allocation2] sm:$0x3]
          %303 = vst.msk [vmem:[%s194] sm:$0x3] %vm276, %v302
          %v304 = vld [vmem:[#allocation3] sm:$0x3]
          %v305 = vmul.f32 %v304, 0.25
          %306 = vst.msk [vmem:[%s201] sm:$0x3] %vm276, %v305
        $region36: #{tpu_custom_call.1} parent=23 // pred_fallthru
          _
        %s307 = sand.u32 %s82, 1
        %s308 = scalar_lea.sflag [#allocation6], %s307
        %s309 = sand.u32 %s82, 1
        %s310 = smul.addr %s309, 2
        %s311 = scalar_lea.vmem [#allocation7], %s310
        %s312 = sand.u32 %s110, 1
        %s313 = scalar_lea.sflag [#allocation9], %s312
        %s314 = sand.u32 %s110, 1
        %s315 = smul.addr %s314, 2
        %s316 = scalar_lea.vmem [#allocation8], %s315
        // Predicated region
        $region37: #{tpu_custom_call.1} parent=23 // pred_check
          %p317 = pneg %p92
        $region38: #{tpu_custom_call.1} parent=23 // pred_check_branch
          %319 = sbr.rel (%p317) target = $region40
        $region39: #{tpu_custom_call.1} parent=23 // pred_region
          %s320 = smul.u32 2, %s29
          %s322 = ssub.s32 32, 32
          %323 = vsyncadd %s308, %s322
          %s324 = smul.addr %s28, 2
          %s325 = sadd.s32 %s320, %s324
          %s326 = smul.addr %s325, 16
          %s327 = scalar_lea.hbm %s1, %s326
          %s329 = sshll.u32 %s311, 4
          %s330 = int_to_ptr.vmem [resolvable:$true] %s329
          %332 = dma.vmem_to_hbm [thread:$0]  %s330, 32, %s327, %s308
        $region40: #{tpu_custom_call.1} parent=23 // pred_fallthru
          _
        // Predicated region
        $region41: #{tpu_custom_call.1} parent=23 // pred_check
          %p333 = pneg %p120
        $region42: #{tpu_custom_call.1} parent=23 // pred_check_branch
          %335 = sbr.rel (%p333) target = $region44
        $region43: #{tpu_custom_call.1} parent=23 // pred_region
          %s336 = smul.u32 2, %s29
          %s338 = ssub.s32 32, 32
          %339 = vsyncadd %s313, %s338
          %s340 = smul.addr %s28, 2
          %s341 = sadd.s32 %s336, %s340
          %s342 = smul.addr %s341, 16
          %s343 = scalar_lea.hbm %s2, %s342
          %s345 = sshll.u32 %s316, 4
          %s346 = int_to_ptr.vmem [resolvable:$true] %s345
          %348 = dma.vmem_to_hbm [thread:$0]  %s346, 32, %s343, %s313
        $region44: #{tpu_custom_call.1} parent=23 // pred_fallthru
          _
      $region24: #{tpu_custom_call.1} parent=5 // pred_fallthru
        _
      %p349 = scmp.le.s32.totalorder 2, %s18
      // Predicated region
      $region45: #{tpu_custom_call.1} parent=5 // pred_check
        %p350 = pneg %p349
      $region46: #{tpu_custom_call.1} parent=5 // pred_check_branch
        %352 = sbr.rel (%p350) target = $region48
      $region47: #{tpu_custom_call.1} parent=5 // pred_region
        %s353 = ssub.s32 %s18, 2
        // Predicated region
        $region49: #{tpu_custom_call.1} parent=47 // pred_check
          %p354 = pneg %p98
        $region50: #{tpu_custom_call.1} parent=47 // pred_check_branch
          %356 = sbr.rel (%p354) target = $region52
        $region51: #{tpu_custom_call.1} parent=47 // pred_region
          %s357 = sand.u32 %s83, 1
          %s358 = scalar_lea.sflag [#allocation6], %s357
          %s359 = sand.u32 %s83, 1
          %s360 = smul.addr %s359, 2
          %s361 = scalar_lea.vmem [#allocation7], %s360
          %362 = dma.done %s358, 32
        $region52: #{tpu_custom_call.1} parent=47 // pred_fallthru
          _
        // Predicated region
        $region53: #{tpu_custom_call.1} parent=47 // pred_check
          %p363 = pneg %p126
        $region54: #{tpu_custom_call.1} parent=47 // pred_check_branch
          %365 = sbr.rel (%p363) target = $region56
        $region55: #{tpu_custom_call.1} parent=47 // pred_region
          %s366 = sand.u32 %s111, 1
          %s367 = scalar_lea.sflag [#allocation9], %s366
          %s368 = sand.u32 %s111, 1
          %s369 = smul.addr %s368, 2
          %s370 = scalar_lea.vmem [#allocation8], %s369
          %371 = dma.done %s367, 32
        $region56: #{tpu_custom_call.1} parent=47 // pred_fallthru
          _
      $region48: #{tpu_custom_call.1} parent=5 // pred_fallthru
        _
    $region6: #{tpu_custom_call.1} parent=1 // loop_footer
      %s22 = sadd.s32 1, %s18
    $region7: #{tpu_custom_call.1} parent=1 // loop_footer_branch
      %17 = sbr.rel target = $region3
    $region8: #{tpu_custom_call.1} parent=1 // loop_exit
      _
    %372 = vsyncpa [#allocation5], 1
    %s373 = scalar_lea.sflag [#allocation5], 1
    %374 = vsyncpa %s373, 1
    %375 = vsyncpa [#allocation6], 1
    %s376 = scalar_lea.sflag [#allocation6], 1
    %377 = vsyncpa %s376, 1
    %378 = vsyncpa [#allocation9], 1
    %s379 = scalar_lea.sflag [#allocation9], 1
    %380 = vsyncpa %s379, 1

</llo_original>
